<compile_context>
chip_gen: v7x
topology: tpu7x:2x2x1
jax: 0.10.0
libtpu: 0.0.40
codegen_flags: <defaults>
</compile_context>

<pallas_src>
import jax
import jax.numpy as jnp
from jax.experimental import pallas as pl
from jax.experimental.pallas import tpu as pltpu


def mlp_kernel(xt_ref, w1_ref, b1_ref, w2_ref, b2_ref, ot_ref):
    xt = xt_ref[...]                                                  # (64, TB)
    # h^T = W1 @ x^T + b1, ReLU                                       (32, TB)
    h = jnp.dot(w1_ref[...], xt,
                preferred_element_type=jnp.float32) + b1_ref[...]
    h = jnp.maximum(h, 0.0)
    # logits^T = W2 @ h^T + b2                                        (3, TB)
    logits = jnp.dot(w2_ref[...], h,
                     preferred_element_type=jnp.float32) + b2_ref[...]
    # numerically-stable softmax over the class axis (torch dim=1 -> axis 0)
    m = jnp.max(logits, axis=0, keepdims=True)                        # (1, TB)
    e = jnp.exp(logits - m)
    denom = jnp.sum(e, axis=0, keepdims=True)                         # (1, TB)
    ot_ref[...] = (e / denom).astype(ot_ref.dtype)                    # exact


def _round_up(v, m):
    return ((v + m - 1) // m) * m


def mlp_forward(x, w1, b1, w2, b2, *, max_tb=8192):
    """x: (B, 8, 8) or (B, 64).  w1: (32, 64), b1: (32,), w2: (3, 32),
    b2: (3,) (PyTorch nn.Linear layouts).  Returns (B, 3) probabilities."""
    B = x.shape[0]
    x2d = x.reshape(B, -1).astype(jnp.float32)          # nn.Flatten()
    assert x2d.shape[1] == 64, "MLP expects 64 flattened features"
    xt = x2d.T                                           # (64, B): batch in lanes

    # Batch tile: multiple of 128 (lane axis).  Large batches are split into
    # >=2 grid steps so v7x can shard the "parallel" axis across its 2 TCs.
    TB = min(max_tb, _round_up(B, 128))
    if B > 256:
        TB = min(TB, _round_up(pl.cdiv(B, 2), 128))
    TB = max(TB, 128)
    grid = (pl.cdiv(B, TB),)                             # ragged tail is masked

    b1c = b1.reshape(32, 1).astype(jnp.float32)
    b2c = b2.reshape(3, 1).astype(jnp.float32)

    out_t = pl.pallas_call(
        mlp_kernel,
        out_shape=jax.ShapeDtypeStruct((3, B), jnp.float32),
        grid=grid,
        in_specs=[
            pl.BlockSpec((64, TB), lambda i: (0, i)),    # x^T: tiled along batch
            pl.BlockSpec((32, 64), lambda i: (0, 0)),    # W1: resident
            pl.BlockSpec((32, 1), lambda i: (0, 0)),     # b1: resident
            pl.BlockSpec((3, 32), lambda i: (0, 0)),     # W2: resident
            pl.BlockSpec((3, 1), lambda i: (0, 0)),      # b2: resident
        ],
        out_specs=pl.BlockSpec((3, TB), lambda i: (0, i)),  # lane-dense output
        compiler_params=pltpu.CompilerParams(
            dimension_semantics=("parallel",)),
    )(xt, w1.astype(jnp.float32), b1c, w2.astype(jnp.float32), b2c)
    return out_t.T                                       # (B, 3)


def mlp_reference(x, w1, b1, w2, b2):
    """Pure-JAX reference matching the PyTorch module."""
    B = x.shape[0]
    x2d = x.reshape(B, -1).astype(jnp.float32)
    h = jnp.maximum(x2d @ w1.T + b1, 0.0)
    logits = h @ w2.T + b2
    return jax.nn.softmax(logits, axis=-1)


def init_params(key):
    """PyTorch Linear default init U(-1/sqrt(in), 1/sqrt(in)), (out, in) layout."""
    k1, k2, k3, k4 = jax.random.split(key, 4)
    lim1 = 1.0 / jnp.sqrt(64.0)
    lim2 = 1.0 / jnp.sqrt(32.0)
    w1 = jax.random.uniform(k1, (32, 64), jnp.float32, -lim1, lim1)
    b1 = jax.random.uniform(k2, (32,), jnp.float32, -lim1, lim1)
    w2 = jax.random.uniform(k3, (3, 32), jnp.float32, -lim2, lim2)
    b2 = jax.random.uniform(k4, (3,), jnp.float32, -lim2, lim2)
    return w1, b1, w2, b2


if __name__ == "__main__":
    key = jax.random.PRNGKey(0)
    kx, kx2, kp = jax.random.split(key, 3)

    w1, b1, w2, b2 = init_params(kp)

    # small deterministic input: batch=2, per-sample 8x8 -> flattens to 64
    x = jax.random.normal(kx, (2, 8, 8), jnp.float32)
    out = jax.block_until_ready(mlp_forward(x, w1, b1, w2, b2))
    ref = mlp_reference(x, w1, b1, w2, b2)
    assert out.shape == (2, 3)
    # tolerance covers MXU bf16-pass vs XLA default-precision matmul deltas
    assert jnp.allclose(out, ref, atol=5e-3, rtol=1e-3)
    row_sums = jnp.sum(out, axis=1)
    assert jnp.allclose(row_sums, jnp.ones_like(row_sums), atol=1e-3)

    # batch not a multiple of the 128-lane tile (exercises masked tail block)
    x2 = jax.random.normal(kx2, (37, 8, 8), jnp.float32)
    out2 = jax.block_until_ready(mlp_forward(x2, w1, b1, w2, b2))
    ref2 = mlp_reference(x2, w1, b1, w2, b2)
    assert out2.shape == (37, 3)
    assert jnp.allclose(out2, ref2, atol=5e-3, rtol=1e-3)
    rs2 = jnp.sum(out2, axis=1)
    assert jnp.allclose(rs2, jnp.ones_like(rs2), atol=1e-3)

    print("KERNEL_OK")
</pallas_src>

<mosaic_0001>
module attributes {stable_mosaic.version = 11 : i64} {
  func.func @mlp_kernel(%arg0: i32, %arg1: memref<64x128xf32, #tpu.memory_space<vmem>>, %arg2: memref<32x64xf32, #tpu.memory_space<vmem>>, %arg3: memref<32x1xf32, #tpu.memory_space<vmem>>, %arg4: memref<3x32xf32, #tpu.memory_space<vmem>>, %arg5: memref<3x1xf32, #tpu.memory_space<vmem>>, %arg6: memref<3x128xf32, #tpu.memory_space<vmem>>) attributes {dimension_semantics = [#tpu.dimension_semantics<parallel>], iteration_bounds = array<i64: 1>, scalar_prefetch = 0 : i64, scratch_operands = 0 : i64, tpu.core_type = #tpu.core_type<tc>, window_params = [{transform_indices = @transform_0, window_bounds = array<i64: 64, 128>}, {pipeline_mode = #tpu.pipeline_mode<synchronous>, transform_indices = @transform_1, window_bounds = array<i64: 32, 64>}, {pipeline_mode = #tpu.pipeline_mode<synchronous>, transform_indices = @transform_2, window_bounds = array<i64: 32, 1>}, {pipeline_mode = #tpu.pipeline_mode<synchronous>, transform_indices = @transform_3, window_bounds = array<i64: 3, 32>}, {pipeline_mode = #tpu.pipeline_mode<synchronous>, transform_indices = @transform_4, window_bounds = array<i64: 3, 1>}, {transform_indices = @transform_5, window_bounds = array<i64: 3, 128>}]} {
    %c0 = arith.constant 0 : index
    %c0_0 = arith.constant 0 : index
    %0 = vector.load %arg1[%c0, %c0_0] : memref<64x128xf32, #tpu.memory_space<vmem>>, vector<64x128xf32>
    %c0_1 = arith.constant 0 : index
    %c0_2 = arith.constant 0 : index
    %1 = vector.load %arg2[%c0_1, %c0_2] : memref<32x64xf32, #tpu.memory_space<vmem>>, vector<32x64xf32>
    %cst = arith.constant dense<0.000000e+00> : vector<32x128xf32>
    %2 = tpu.matmul %1, %0, %cst {dimension_numbers = #tpu.dot_dimension_numbers<[1], [0], [0], [1], [0, 0, 1, 1], [], []>} : vector<32x64xf32>, vector<64x128xf32>, vector<32x128xf32> -> vector<32x128xf32>
    %c0_3 = arith.constant 0 : index
    %c0_4 = arith.constant 0 : index
    %3 = vector.load %arg3[%c0_3, %c0_4] : memref<32x1xf32, #tpu.memory_space<vmem>>, vector<32x1xf32>
    %4 = vector.broadcast %3 : vector<32x1xf32> to vector<32x128xf32>
    %5 = arith.addf %2, %4 : vector<32x128xf32>
    %cst_5 = arith.constant 0.000000e+00 : f32
    %6 = vector.broadcast %cst_5 : f32 to vector<32x128xf32>
    %7 = arith.maximumf %5, %6 : vector<32x128xf32>
    %c0_6 = arith.constant 0 : index
    %c0_7 = arith.constant 0 : index
    %8 = vector.load %arg4[%c0_6, %c0_7] : memref<3x32xf32, #tpu.memory_space<vmem>>, vector<3x32xf32>
    %cst_8 = arith.constant dense<0.000000e+00> : vector<3x128xf32>
    %9 = tpu.matmul %8, %7, %cst_8 {dimension_numbers = #tpu.dot_dimension_numbers<[1], [0], [0], [1], [0, 0, 1, 1], [], []>} : vector<3x32xf32>, vector<32x128xf32>, vector<3x128xf32> -> vector<3x128xf32>
    %c0_9 = arith.constant 0 : index
    %c0_10 = arith.constant 0 : index
    %10 = vector.load %arg5[%c0_9, %c0_10] : memref<3x1xf32, #tpu.memory_space<vmem>>, vector<3x1xf32>
    %11 = vector.broadcast %10 : vector<3x1xf32> to vector<3x128xf32>
    %12 = arith.addf %9, %11 : vector<3x128xf32>
    %cst_11 = arith.constant dense<0xFF800000> : vector<128xf32>
    %13 = vector.multi_reduction <maximumf>, %12, %cst_11 [0] : vector<3x128xf32> to vector<128xf32>
    %14 = vector.shape_cast %13 : vector<128xf32> to vector<1x128xf32>
    %15 = vector.broadcast %14 : vector<1x128xf32> to vector<3x128xf32>
    %16 = arith.subf %12, %15 : vector<3x128xf32>
    %17 = math.exp %16 : vector<3x128xf32>
    %cst_12 = arith.constant dense<0.000000e+00> : vector<128xf32>
    %18 = vector.multi_reduction <add>, %17, %cst_12 [0] : vector<3x128xf32> to vector<128xf32>
    %19 = vector.shape_cast %18 : vector<128xf32> to vector<1x128xf32>
    %20 = vector.broadcast %19 : vector<1x128xf32> to vector<3x128xf32>
    %21 = arith.divf %17, %20 : vector<3x128xf32>
    %c0_13 = arith.constant 0 : index
    %c0_14 = arith.constant 0 : index
    %22 = vector.load %arg6[%c0_13, %c0_14] : memref<3x128xf32, #tpu.memory_space<vmem>>, vector<3x128xf32>
    tpu.vector_store %arg6[%c0_13, %c0_14], %21 {strides = array<i32>} : memref<3x128xf32, #tpu.memory_space<vmem>>, vector<3x128xf32>,
    return
  }
  func.func @transform_0(%arg0: i32) -> (i32, i32) {
    %c0_i32 = arith.constant 0 : i32
    %c0_i32_0 = arith.constant 0 : i32
    return %c0_i32, %arg0 : i32, i32
  }
  func.func @transform_1(%arg0: i32) -> (i32, i32) {
    %c0_i32 = arith.constant 0 : i32
    %c0_i32_0 = arith.constant 0 : i32
    %c0_i32_1 = arith.constant 0 : i32
    return %c0_i32, %c0_i32_0 : i32, i32
  }
  func.func @transform_2(%arg0: i32) -> (i32, i32) {
    %c0_i32 = arith.constant 0 : i32
    %c0_i32_0 = arith.constant 0 : i32
    %c0_i32_1 = arith.constant 0 : i32
    return %c0_i32, %c0_i32_0 : i32, i32
  }
  func.func @transform_3(%arg0: i32) -> (i32, i32) {
    %c0_i32 = arith.constant 0 : i32
    %c0_i32_0 = arith.constant 0 : i32
    %c0_i32_1 = arith.constant 0 : i32
    return %c0_i32, %c0_i32_0 : i32, i32
  }
  func.func @transform_4(%arg0: i32) -> (i32, i32) {
    %c0_i32 = arith.constant 0 : i32
    %c0_i32_0 = arith.constant 0 : i32
    %c0_i32_1 = arith.constant 0 : i32
    return %c0_i32, %c0_i32_0 : i32, i32
  }
  func.func @transform_5(%arg0: i32) -> (i32, i32) {
    %c0_i32 = arith.constant 0 : i32
    %c0_i32_0 = arith.constant 0 : i32
    return %c0_i32, %arg0 : i32, i32
  }
}

</mosaic_0001>

<llo_original>
// kernel: tpu_custom_call.1
$region0: #{tpu_custom_call.1}
  #allocation0 [shape = 'u32[]', space=smem, size = 0x4, offset = 0x4, fixed_abs, tag = 'smem constant byte address 0x4 - core index']
  #allocation1 [shape = 'u32[144,128]{1,0:T(1,128)}', space=vmem, size = 0x12000, scoped, tag = 'internal scratch']
  %s0 = inlined_call_operand.vmem [shape: f32[64,2], index: 0, kind: input, shape index: {}]
  %s1 = inlined_call_operand.vmem [shape: f32[32,64], index: 1, kind: input, shape index: {}]
  %s2 = inlined_call_operand.vmem [shape: f32[32,1], index: 2, kind: input, shape index: {}]
  %s3 = inlined_call_operand.vmem [shape: f32[3,32], index: 3, kind: input, shape index: {}]
  %s4 = inlined_call_operand.vmem [shape: f32[3,1], index: 4, kind: input, shape index: {}]
  %s5 = inlined_call_operand.vmem [shape: f32[3,2], index: 5, kind: output, shape index: {}]
  %s6 = sld [smem:[#allocation0]]
  $region30: #{tpu_custom_call.1} parent=0
    _
  %s8 = ssub.s32 1, %s6
  %s9 = scalar_select 0, %s8, %s6
  // Predicated region
  $region2: #{tpu_custom_call.1} parent=0 // pred_check
    _
  $region3: #{tpu_custom_call.1} parent=0 // pred_check_branch
    %11 = sbr.rel (0) target = $region5
  $region4: #{tpu_custom_call.1} parent=0 // pred_region
    _
  $region5: #{tpu_custom_call.1} parent=0 // pred_fallthru
    _
  // Predicated region
  $region6: #{tpu_custom_call.1} parent=0 // pred_check
    _
  $region7: #{tpu_custom_call.1} parent=0 // pred_check_branch
    %13 = sbr.rel (0) target = $region9
  $region8: #{tpu_custom_call.1} parent=0 // pred_region
    _
  $region9: #{tpu_custom_call.1} parent=0 // pred_fallthru
    _
  // Predicated region
  $region10: #{tpu_custom_call.1} parent=0 // pred_check
    _
  $region11: #{tpu_custom_call.1} parent=0 // pred_check_branch
    %15 = sbr.rel (0) target = $region13
  $region12: #{tpu_custom_call.1} parent=0 // pred_region
    _
  $region13: #{tpu_custom_call.1} parent=0 // pred_fallthru
    _
  // Predicated region
  $region14: #{tpu_custom_call.1} parent=0 // pred_check
    _
  $region15: #{tpu_custom_call.1} parent=0 // pred_check_branch
    %17 = sbr.rel (0) target = $region17
  $region16: #{tpu_custom_call.1} parent=0 // pred_region
    _
  $region17: #{tpu_custom_call.1} parent=0 // pred_fallthru
    _
  // Predicated region
  $region18: #{tpu_custom_call.1} parent=0 // pred_check
    _
  $region19: #{tpu_custom_call.1} parent=0 // pred_check_branch
    %19 = sbr.rel (0) target = $region21
  $region20: #{tpu_custom_call.1} parent=0 // pred_region
    _
  $region21: #{tpu_custom_call.1} parent=0 // pred_fallthru
    _
  %v20 = vld [vmem:[%s0] sm:$0xff]
  %v21 = vld [vmem:[%s0 + $0x8] sm:$0xff]
  %v22 = vld [vmem:[%s0 + $0x10] sm:$0xff]
  %v23 = vld [vmem:[%s0 + $0x18] sm:$0xff]
  %v24 = vld [vmem:[%s0 + $0x20] sm:$0xff]
  %v25 = vld [vmem:[%s0 + $0x28] sm:$0xff]
  %v26 = vld [vmem:[%s0 + $0x30] sm:$0xff]
  %v27 = vld [vmem:[%s0 + $0x38] sm:$0xff]
  %v28 = vld [vmem:[%s1] sm:$0xff]
  %v29 = vld [vmem:[%s1 + $0x8] sm:$0xff]
  %v30 = vld [vmem:[%s1 + $0x10] sm:$0xff]
  %v31 = vld [vmem:[%s1 + $0x18] sm:$0xff]
  %v32 = vld [vmem:[%s2] sm:$0xff]
  %v33 = vld [vmem:[%s2 + $0x8] sm:$0xff]
  %v34 = vld [vmem:[%s2 + $0x10] sm:$0xff]
  %v35 = vld [vmem:[%s2 + $0x18] sm:$0xff]
  %37 = vset.pattern.permute.xlu0 0
  %38 = vperm.xlu0 %37, %v32
  %v39 = vpop.permute.xlu0 %38
  %42 = vset.pattern.permute.xlu0 0
  %43 = vperm.xlu0 %42, %v33
  %v44 = vpop.permute.xlu0 %43
  %47 = vset.pattern.permute.xlu0 0
  %48 = vperm.xlu0 %47, %v34
  %v49 = vpop.permute.xlu0 %48
  %52 = vset.pattern.permute.xlu0 0
  %53 = vperm.xlu0 %52, %v35
  %v54 = vpop.permute.xlu0 %53
  %vm56 = vcmask 523264
  %v58 = vsel %vm56, %v28, 0
  %v61 = vsel %vm56, %v29, 0
  %v64 = vsel %vm56, %v30, 0
  %v67 = vsel %vm56, %v31, 0
  %69 = vmatprep.subr.mxu0 0.0
  %70 = vmatpush1.msra.mxu0 %v20
  %71 = vmatprep.subr.mxu0 0.0
  %72 = vmatpush1.msra.mxu0 %v21
  %73 = vmatprep.subr.mxu0 0.0
  %74 = vmatpush1.msra.mxu0 %v22
  %75 = vmatprep.subr.mxu0 0.0
  %76 = vmatpush1.msra.mxu0 %v23
  %77 = vmatprep.subr.mxu0 0.0
  %78 = vmatpush1.msra.mxu0 %v24
  %79 = vmatprep.subr.mxu0 0.0
  %80 = vmatpush1.msra.mxu0 %v25
  %81 = vmatprep.subr.mxu0 0.0
  %82 = vmatpush1.msra.mxu0 %v26
  %83 = vmatprep.subr.mxu0 0.0
  %84 = vmatpush1.msra.mxu0 %v27
  %85 = vmatprep.subr.mxu0 0.0
  %86 = vmatpush1.msra.mxu0 0.0
  %87 = vmatprep.subr.mxu0 0.0
  %88 = vmatpush1.msra.mxu0 0.0
  %89 = vmatprep.subr.mxu0 0.0
  %90 = vmatpush1.msra.mxu0 0.0
  %91 = vmatprep.subr.mxu0 0.0
  %92 = vmatpush1.msra.mxu0 0.0
  %93 = vmatprep.subr.mxu0 0.0
  %94 = vmatpush1.msra.mxu0 0.0
  %95 = vmatprep.subr.mxu0 0.0
  %96 = vmatpush1.msra.mxu0 0.0
  %97 = vmatprep.subr.mxu0 0.0
  %98 = vmatpush1.msra.mxu0 0.0
  %99 = vmatprep.subr.mxu0 0.0
  %100 = vmatpush1.msra.mxu0 0.0
  %101 = vmatprep.subr.mxu0 0.0
  %102 = vmatpush1.msra.mxu0 0.0
  %103 = vmatprep.subr.mxu0 0.0
  %104 = vmatpush1.msra.mxu0 0.0
  %105 = vmatprep.subr.mxu0 0.0
  %106 = vmatpush1.msra.mxu0 0.0
  %107 = vmatprep.subr.mxu0 0.0
  %108 = vmatpush1.msra.mxu0 0.0
  %109 = vmatprep.subr.mxu0 0.0
  %110 = vmatpush1.msra.mxu0 0.0
  %111 = vmatprep.subr.mxu0 0.0
  %112 = vmatpush1.msra.mxu0 0.0
  %113 = vmatprep.subr.mxu0 0.0
  %114 = vmatpush1.msra.mxu0 0.0
  %115 = vmatprep.subr.mxu0 0.0
  %116 = vmatpush1.msra.mxu0 0.0
  %117 = vmatprep.subr.mxu0 0.0
  %118 = vmatpush1.msra.mxu0 0.0
  %119 = vmatprep.subr.mxu0 0.0
  %120 = vmatpush1.msra.mxu0 0.0
  %121 = vmatprep.subr.mxu0 0.0
  %122 = vmatpush1.msra.mxu0 0.0
  %123 = vmatprep.subr.mxu0 0.0
  %124 = vmatpush1.msra.mxu0 0.0
  %125 = vmatprep.subr.mxu0 0.0
  %126 = vmatpush1.msra.mxu0 0.0
  %127 = vmatprep.subr.mxu0 0.0
  %128 = vmatpush1.msra.mxu0 0.0
  %129 = vmatprep.subr.mxu0 0.0
  %130 = vmatpush1.msra.mxu0 0.0
  %131 = vmatprep.subr.mxu0 0.0
  %132 = vmatpush1.msra.mxu0 0.0
  %133 = vmatprep.mubr.f32.mxu0 0.0
  %134 = vmatmul.mubr.f32.gmra.mrb[0].mxu0 %v58
  %v135 = vpop.f32.mrb[0].mxu0
  %v136 = vadd.f32 %v39, %v135
  %v137 = vpop.f32.mrb[0].mxu0
  %138 = vmatprep.mubr.f32.mxu0 0.0
  %139 = vmatmul.mubr.f32.gmra.mrb[0].mxu0 %v61
  %v140 = vpop.f32.mrb[0].mxu0
  %v141 = vadd.f32 %v44, %v140
  %v142 = vpop.f32.mrb[0].mxu0
  %143 = vmatprep.mubr.f32.mxu0 0.0
  %144 = vmatmul.mubr.f32.gmra.mrb[0].mxu0 %v64
  %v145 = vpop.f32.mrb[0].mxu0
  %v146 = vadd.f32 %v49, %v145
  %v147 = vpop.f32.mrb[0].mxu0
  %148 = vmatprep.mubr.f32.mxu0 0.0
  %149 = vmatmul.mubr.f32.gmra.mrb[0].mxu0 %v67
  %v150 = vpop.f32.mrb[0].mxu0
  %v151 = vadd.f32 %v54, %v150
  %v152 = vpop.f32.mrb[0].mxu0
  %153 = vdwg.mxu0
  %v154 = vmax.f32 %v136, 0.0
  %v155 = vmax.f32 %v141, 0.0
  %v156 = vmax.f32 %v146, 0.0
  %v157 = vmax.f32 %v151, 0.0
  %v158 = vld [vmem:[%s3] sm:$0x7]
  %v159 = vld [vmem:[%s4] sm:$0x7]
  %161 = vset.pattern.permute.xlu0 0
  %162 = vperm.xlu0 %161, %v159
  %v163 = vpop.permute.xlu0 %162
  %vm165 = vcmask 261120
  %v167 = vsel %vm165, %v158, 0
  %169 = vmatprep.subr.mxu0 0.0
  %170 = vmatpush1.msra.mxu0 %v154
  %171 = vmatprep.subr.mxu0 0.0
  %172 = vmatpush1.msra.mxu0 %v155
  %173 = vmatprep.subr.mxu0 0.0
  %174 = vmatpush1.msra.mxu0 %v156
  %175 = vmatprep.subr.mxu0 0.0
  %176 = vmatpush1.msra.mxu0 %v157
  %177 = vmatprep.subr.mxu0 0.0
  %178 = vmatpush1.msra.mxu0 0.0
  %179 = vmatprep.subr.mxu0 0.0
  %180 = vmatpush1.msra.mxu0 0.0
  %181 = vmatprep.subr.mxu0 0.0
  %182 = vmatpush1.msra.mxu0 0.0
  %183 = vmatprep.subr.mxu0 0.0
  %184 = vmatpush1.msra.mxu0 0.0
  %185 = vmatprep.subr.mxu0 0.0
  %186 = vmatpush1.msra.mxu0 0.0
  %187 = vmatprep.subr.mxu0 0.0
  %188 = vmatpush1.msra.mxu0 0.0
  %189 = vmatprep.subr.mxu0 0.0
  %190 = vmatpush1.msra.mxu0 0.0
  %191 = vmatprep.subr.mxu0 0.0
  %192 = vmatpush1.msra.mxu0 0.0
  %193 = vmatprep.subr.mxu0 0.0
  %194 = vmatpush1.msra.mxu0 0.0
  %195 = vmatprep.subr.mxu0 0.0
  %196 = vmatpush1.msra.mxu0 0.0
  %197 = vmatprep.subr.mxu0 0.0
  %198 = vmatpush1.msra.mxu0 0.0
  %199 = vmatprep.subr.mxu0 0.0
  %200 = vmatpush1.msra.mxu0 0.0
  %201 = vmatprep.subr.mxu0 0.0
  %202 = vmatpush1.msra.mxu0 0.0
  %203 = vmatprep.subr.mxu0 0.0
  %204 = vmatpush1.msra.mxu0 0.0
  %205 = vmatprep.subr.mxu0 0.0
  %206 = vmatpush1.msra.mxu0 0.0
  %207 = vmatprep.subr.mxu0 0.0
  %208 = vmatpush1.msra.mxu0 0.0
  %209 = vmatprep.subr.mxu0 0.0
  %210 = vmatpush1.msra.mxu0 0.0
  %211 = vmatprep.subr.mxu0 0.0
  %212 = vmatpush1.msra.mxu0 0.0
  %213 = vmatprep.subr.mxu0 0.0
  %214 = vmatpush1.msra.mxu0 0.0
  %215 = vmatprep.subr.mxu0 0.0
  %216 = vmatpush1.msra.mxu0 0.0
  %217 = vmatprep.subr.mxu0 0.0
  %218 = vmatpush1.msra.mxu0 0.0
  %219 = vmatprep.subr.mxu0 0.0
  %220 = vmatpush1.msra.mxu0 0.0
  %221 = vmatprep.subr.mxu0 0.0
  %222 = vmatpush1.msra.mxu0 0.0
  %223 = vmatprep.subr.mxu0 0.0
  %224 = vmatpush1.msra.mxu0 0.0
  %225 = vmatprep.subr.mxu0 0.0
  %226 = vmatpush1.msra.mxu0 0.0
  %227 = vmatprep.subr.mxu0 0.0
  %228 = vmatpush1.msra.mxu0 0.0
  %229 = vmatprep.subr.mxu0 0.0
  %230 = vmatpush1.msra.mxu0 0.0
  %231 = vmatprep.subr.mxu0 0.0
  %232 = vmatpush1.msra.mxu0 0.0
  %233 = vmatprep.mubr.f32.mxu0 0.0
  %234 = vmatmul.mubr.f32.gmra.mrb[0].mxu0 %v167
  %v235 = vpop.f32.mrb[0].mxu0
  %v236 = vadd.f32 %v163, %v235
  %v237 = vpop.f32.mrb[0].mxu0
  %238 = vdwg.mxu0
  %vm239 = vcmask 1042432
  %v240 = vsel %vm239, %v236, -inf
  %v241 = vrot.slane %v240, 4
  %v242 = vmax.f32 %v240, %v241
  %v243 = vrot.slane %v242, 2
  %v244 = vmax.f32 %v242, %v243
  %v245 = vrot.slane %v244, 1
  %v246 = vmax.f32 %v244, %v245
  %v247 = vsub.f32 %v236, %v246
  %v248 = vmul.f32 %v247, 1.442695
  %v249 = vpow.pop %v248
  %v250 = vsel %vm239, %v249, 0.0
  %v251 = vrot.slane %v250, 4
  %v252 = vadd.f32 %v250, %v251
  %v253 = vrot.slane %v252, 2
  %v254 = vadd.f32 %v252, %v253
  %v255 = vrot.slane %v254, 1
  %v256 = vadd.f32 %v254, %v255
  %v257 = vrcp.pop %v256
  %v258 = vmul.f32 %v249, %v257
  %259 = vst [vmem:[%s5] sm:$0x7] %v258
  // Predicated region
  $region22: #{tpu_custom_call.1} parent=0 // pred_check
    _
  $region23: #{tpu_custom_call.1} parent=0 // pred_check_branch
    %261 = sbr.rel (0) target = $region25
  $region24: #{tpu_custom_call.1} parent=0 // pred_region
    _
  $region25: #{tpu_custom_call.1} parent=0 // pred_fallthru
    _
  // Predicated region
  $region26: #{tpu_custom_call.1} parent=0 // pred_check
    _
  $region27: #{tpu_custom_call.1} parent=0 // pred_check_branch
    %263 = sbr.rel (0) target = $region29
  $region28: #{tpu_custom_call.1} parent=0 // pred_region
    _
  $region29: #{tpu_custom_call.1} parent=0 // pred_fallthru
    _

</llo_original>
